<compile_context>
chip_gen: v6e
topology: v6e:2x2x1
jax: 0.10.0
libtpu: 0.0.40
codegen_flags: <defaults>
</compile_context>

<pallas_src>
import functools

import jax
import jax.numpy as jnp
from jax.experimental import pallas as pl
from jax.experimental.pallas import tpu as pltpu


def _global_block_mlp_kernel(x_ref, w1_ref, b1_ref, w2_ref, b2_ref,
                             wc_ref, bc_ref, gamma_ref, beta_ref, o_ref, *, eps):
    """Fused token-MLP + channel-MLP + residual + LayerNorm for one batch tile.

    x_ref / o_ref : (bt*T, C)     tokens, rows ordered (batch, token), C on lanes
    w1_ref        : (bt*Th, bt*T) block-diag token_mlp Linear 1 (pre-transposed)
    b1_ref        : (bt*Th, 1)
    w2_ref        : (bt*T, bt*Th) block-diag token_mlp Linear 2 (pre-transposed)
    b2_ref        : (bt*T, 1)
    wc_ref        : (C, C)        channel_mlp (right-multiply convention)
    bc_ref        : (1, C)
    gamma_ref     : (1, C)        LayerNorm affine
    beta_ref      : (1, C)
    """
    x = x_ref[...]                                                        # (bt*T, C)

    # token_mlp: mixes over the token axis via block-diagonal matmuls;
    # C stays on the lane axis throughout (no relayout).
    h = jnp.dot(w1_ref[...], x, preferred_element_type=jnp.float32) + b1_ref[...]
    h = jax.nn.gelu(h, approximate=True)                                  # (bt*Th, C)
    t_mix = jnp.dot(w2_ref[...], h, preferred_element_type=jnp.float32) + b2_ref[...]

    # channel_mlp over the channel axis, one big matmul for the whole tile.
    y = jnp.dot(t_mix, wc_ref[...], preferred_element_type=jnp.float32) + bc_ref[...]

    # residual (DropPath at rate 0.0 is identity) + LayerNorm over C.
    r = x + y
    mu = jnp.mean(r, axis=-1, keepdims=True)
    var = jnp.mean((r - mu) * (r - mu), axis=-1, keepdims=True)
    out = (r - mu) * jax.lax.rsqrt(var + eps) * gamma_ref[...] + beta_ref[...]
    o_ref[...] = out.astype(o_ref.dtype)


def _pick_batch_tile(B, T, C, Th, itemsize=4,
                     target_block_bytes=1 << 20, max_blockdiag_rows=256):
    """Pick the batch tile bt (a divisor of B) such that
       * bt*T is a multiple of 8 (sublane-friendly block) OR the block is the
         full array,
       * the (bt*T, C) x/out block stays under ~1 MiB (double-buffered blocks
         remain comfortably inside v7x's smaller scoped VMEM),
       * the block-diagonal token-mix weights stay small (their MAC count
         grows ~bt^2), capped at bt*Th <= max_blockdiag_rows.
    Returns the largest tile satisfying the caps (falls back to the smallest
    legal tile otherwise)."""
    candidates = [bt for bt in range(1, B + 1)
                  if B % bt == 0 and ((bt * T) % 8 == 0 or bt == B)]
    best = candidates[0]
    for bt in candidates:
        if bt * T * C * itemsize <= target_block_bytes and bt * Th <= max_blockdiag_rows:
            best = bt
    return best


def global_block_mlp(x, params, *, eps=1e-5, batch_tile=None):
    """Pallas implementation of GlobalBlock.forward for the default config
    (block_type='mlp', use_dynamic=False, use_ffn=False, drop_path_rate=0.0).

    x      : (T, B, C) tokens  (token_num, batch, token_dim)
    params : dict with
        'w1': (T, Th)  'b1': (Th,)   token_mlp Linear 1   (y = x @ w1 + b1)
        'w2': (Th, T)  'b2': (T,)    token_mlp Linear 2
        'wc': (C, C)   'bc': (C,)    channel_mlp
        'gamma': (C,)  'beta': (C,)  layer_norm affine
    """
    T, B, C = x.shape
    Th = params["w1"].shape[1]
    orig_dtype = x.dtype

    bt = batch_tile or _pick_batch_tile(B, T, C, Th)
    assert B % bt == 0, "batch must be divisible by the batch tile"
    assert (bt * T) % 8 == 0 or bt == B, "tile rows must be sublane friendly"
    rows = bt * T
    grid = (B // bt,)

    # (B*T, C) layout: rows ordered (batch, token); C rides the lanes.
    x2d = jnp.transpose(x, (1, 0, 2)).reshape(B * T, C).astype(jnp.float32)

    # Pre-transpose token-mix weights (h = w1t @ x keeps C on lanes) and build
    # block-diagonal versions so one matmul handles the whole batch tile.
    w1t = params["w1"].astype(jnp.float32).T               # (Th, T)
    w2t = params["w2"].astype(jnp.float32).T               # (T, Th)
    eye = jnp.eye(bt, dtype=jnp.float32)
    w1_blk = jnp.kron(eye, w1t)                            # (bt*Th, bt*T)
    w2_blk = jnp.kron(eye, w2t)                            # (bt*T, bt*Th)
    b1_blk = jnp.tile(params["b1"].astype(jnp.float32), bt).reshape(bt * Th, 1)
    b2_blk = jnp.tile(params["b2"].astype(jnp.float32), bt).reshape(bt * T, 1)
    wc = params["wc"].astype(jnp.float32)                  # (C, C)
    bc = params["bc"].astype(jnp.float32).reshape(1, C)
    gamma = params["gamma"].astype(jnp.float32).reshape(1, C)
    beta = params["beta"].astype(jnp.float32).reshape(1, C)

    def const_spec(arr):
        # Same block index every step -> weight stays resident in VMEM.
        return pl.BlockSpec(arr.shape, lambda i: (0, 0))

    out2d = pl.pallas_call(
        functools.partial(_global_block_mlp_kernel, eps=eps),
        out_shape=jax.ShapeDtypeStruct((B * T, C), jnp.float32),
        grid_spec=pltpu.PrefetchScalarGridSpec(
            num_scalar_prefetch=0,
            grid=grid,
            in_specs=[
                pl.BlockSpec((rows, C), lambda i: (i, 0)),
                const_spec(w1_blk), const_spec(b1_blk),
                const_spec(w2_blk), const_spec(b2_blk),
                const_spec(wc), const_spec(bc),
                const_spec(gamma), const_spec(beta),
            ],
            out_specs=pl.BlockSpec((rows, C), lambda i: (i, 0)),
        ),
        compiler_params=pltpu.CompilerParams(
            dimension_semantics=("parallel",)),
    )(x2d, w1_blk, b1_blk, w2_blk, b2_blk, wc, bc, gamma, beta)

    out = out2d.reshape(B, T, C).transpose(1, 0, 2)
    return out.astype(orig_dtype)


def global_block_mlp_ref(x, params, eps=1e-5):
    """Pure-JAX reference mirroring the PyTorch forward (default config)."""
    w1, b1 = params["w1"], params["b1"]
    w2, b2 = params["w2"], params["b2"]
    wc, bc = params["wc"], params["bc"]
    gamma, beta = params["gamma"], params["beta"]

    tokens = x.astype(jnp.float32)
    t = jnp.transpose(tokens, (1, 2, 0))                       # (B, C, T)
    t = jax.nn.gelu(t @ w1 + b1, approximate=True) @ w2 + b2   # token_mlp
    t_sum = jnp.transpose(t, (2, 0, 1))                        # (T, B, C)
    t_sum = t_sum @ wc + bc                                    # channel_mlp
    out = tokens + t_sum                                       # drop_path(0.) == id
    mu = out.mean(-1, keepdims=True)
    var = ((out - mu) ** 2).mean(-1, keepdims=True)
    return ((out - mu) / jnp.sqrt(var + eps)) * gamma + beta


if __name__ == "__main__":
    key = jax.random.PRNGKey(0)
    ks = jax.random.split(key, 7)

    T, B, C = 6, 2, 128          # token_num, batch, token_dim (module defaults)
    Th = 4 * T                   # mlp_token_exp = 4

    x = jax.random.normal(ks[0], (T, B, C), dtype=jnp.float32)
    params = {
        "w1": jax.random.normal(ks[1], (T, Th), jnp.float32) / jnp.sqrt(T),
        "b1": 0.02 * jax.random.normal(ks[2], (Th,), jnp.float32),
        "w2": jax.random.normal(ks[3], (Th, T), jnp.float32) / jnp.sqrt(Th),
        "b2": 0.02 * jax.random.normal(ks[4], (T,), jnp.float32),
        "wc": jax.random.normal(ks[5], (C, C), jnp.float32) / jnp.sqrt(C),
        "bc": 0.02 * jax.random.normal(ks[6], (C,), jnp.float32),
        "gamma": jnp.ones((C,), jnp.float32),
        "beta": jnp.zeros((C,), jnp.float32),
    }

    out = global_block_mlp(x, params)
    out = jax.block_until_ready(out)

    ref = global_block_mlp_ref(x, params)

    assert out.shape == (T, B, C)
    max_err = jnp.max(jnp.abs(out - ref))
    assert jnp.allclose(out, ref, atol=1e-2, rtol=1e-2), (
        f"Pallas GlobalBlock mismatch vs reference (max abs err = {max_err})")

    print("KERNEL_OK")
</pallas_src>

<mosaic_0001>
module attributes {stable_mosaic.version = 11 : i64} {
  func.func @_global_block_mlp_kernel(%arg0: i32, %arg1: memref<12x128xf32, #tpu.memory_space<vmem>>, %arg2: memref<48x12xf32, #tpu.memory_space<vmem>>, %arg3: memref<48x1xf32, #tpu.memory_space<vmem>>, %arg4: memref<12x48xf32, #tpu.memory_space<vmem>>, %arg5: memref<12x1xf32, #tpu.memory_space<vmem>>, %arg6: memref<128x128xf32, #tpu.memory_space<vmem>>, %arg7: memref<1x128xf32, #tpu.memory_space<vmem>>, %arg8: memref<1x128xf32, #tpu.memory_space<vmem>>, %arg9: memref<1x128xf32, #tpu.memory_space<vmem>>, %arg10: memref<12x128xf32, #tpu.memory_space<vmem>>) attributes {dimension_semantics = [#tpu.dimension_semantics<parallel>], iteration_bounds = array<i64: 1>, scalar_prefetch = 0 : i64, scratch_operands = 0 : i64, tpu.core_type = #tpu.core_type<tc>, window_params = [{transform_indices = @transform_0, window_bounds = array<i64: 12, 128>}, {pipeline_mode = #tpu.pipeline_mode<synchronous>, transform_indices = @transform_1, window_bounds = array<i64: 48, 12>}, {pipeline_mode = #tpu.pipeline_mode<synchronous>, transform_indices = @transform_2, window_bounds = array<i64: 48, 1>}, {pipeline_mode = #tpu.pipeline_mode<synchronous>, transform_indices = @transform_3, window_bounds = array<i64: 12, 48>}, {pipeline_mode = #tpu.pipeline_mode<synchronous>, transform_indices = @transform_4, window_bounds = array<i64: 12, 1>}, {pipeline_mode = #tpu.pipeline_mode<synchronous>, transform_indices = @transform_5, window_bounds = array<i64: 128, 128>}, {pipeline_mode = #tpu.pipeline_mode<synchronous>, transform_indices = @transform_6, window_bounds = array<i64: 1, 128>}, {pipeline_mode = #tpu.pipeline_mode<synchronous>, transform_indices = @transform_7, window_bounds = array<i64: 1, 128>}, {pipeline_mode = #tpu.pipeline_mode<synchronous>, transform_indices = @transform_8, window_bounds = array<i64: 1, 128>}, {transform_indices = @transform_9, window_bounds = array<i64: 12, 128>}]} {
    %c0 = arith.constant 0 : index
    %c0_0 = arith.constant 0 : index
    %0 = vector.load %arg1[%c0, %c0_0] : memref<12x128xf32, #tpu.memory_space<vmem>>, vector<12x128xf32>
    %c0_1 = arith.constant 0 : index
    %c0_2 = arith.constant 0 : index
    %1 = vector.load %arg2[%c0_1, %c0_2] : memref<48x12xf32, #tpu.memory_space<vmem>>, vector<48x12xf32>
    %cst = arith.constant dense<0.000000e+00> : vector<48x128xf32>
    %2 = tpu.matmul %1, %0, %cst {dimension_numbers = #tpu.dot_dimension_numbers<[1], [0], [0], [1], [0, 0, 1, 1], [], []>} : vector<48x12xf32>, vector<12x128xf32>, vector<48x128xf32> -> vector<48x128xf32>
    %c0_3 = arith.constant 0 : index
    %c0_4 = arith.constant 0 : index
    %3 = vector.load %arg3[%c0_3, %c0_4] : memref<48x1xf32, #tpu.memory_space<vmem>>, vector<48x1xf32>
    %4 = vector.broadcast %3 : vector<48x1xf32> to vector<48x128xf32>
    %5 = arith.addf %2, %4 : vector<48x128xf32>
    %6 = arith.mulf %5, %5 : vector<48x128xf32>
    %7 = arith.mulf %5, %6 : vector<48x128xf32>
    %cst_5 = arith.constant 4.471500e-02 : f32
    %8 = vector.broadcast %cst_5 : f32 to vector<48x128xf32>
    %9 = arith.mulf %8, %7 : vector<48x128xf32>
    %10 = arith.addf %5, %9 : vector<48x128xf32>
    %cst_6 = arith.constant 0.797884583 : f32
    %11 = vector.broadcast %cst_6 : f32 to vector<48x128xf32>
    %12 = arith.mulf %11, %10 : vector<48x128xf32>
    %13 = math.tanh %12 : vector<48x128xf32>
    %cst_7 = arith.constant 1.000000e+00 : f32
    %14 = vector.broadcast %cst_7 : f32 to vector<48x128xf32>
    %15 = arith.addf %14, %13 : vector<48x128xf32>
    %cst_8 = arith.constant 5.000000e-01 : f32
    %16 = vector.broadcast %cst_8 : f32 to vector<48x128xf32>
    %17 = arith.mulf %16, %15 : vector<48x128xf32>
    %18 = arith.mulf %5, %17 : vector<48x128xf32>
    %c0_9 = arith.constant 0 : index
    %c0_10 = arith.constant 0 : index
    %19 = vector.load %arg4[%c0_9, %c0_10] : memref<12x48xf32, #tpu.memory_space<vmem>>, vector<12x48xf32>
    %cst_11 = arith.constant dense<0.000000e+00> : vector<12x128xf32>
    %20 = tpu.matmul %19, %18, %cst_11 {dimension_numbers = #tpu.dot_dimension_numbers<[1], [0], [0], [1], [0, 0, 1, 1], [], []>} : vector<12x48xf32>, vector<48x128xf32>, vector<12x128xf32> -> vector<12x128xf32>
    %c0_12 = arith.constant 0 : index
    %c0_13 = arith.constant 0 : index
    %21 = vector.load %arg5[%c0_12, %c0_13] : memref<12x1xf32, #tpu.memory_space<vmem>>, vector<12x1xf32>
    %22 = vector.broadcast %21 : vector<12x1xf32> to vector<12x128xf32>
    %23 = arith.addf %20, %22 : vector<12x128xf32>
    %c0_14 = arith.constant 0 : index
    %c0_15 = arith.constant 0 : index
    %24 = vector.load %arg6[%c0_14, %c0_15] : memref<128x128xf32, #tpu.memory_space<vmem>>, vector<128x128xf32>
    %cst_16 = arith.constant dense<0.000000e+00> : vector<12x128xf32>
    %25 = tpu.matmul %23, %24, %cst_16 {dimension_numbers = #tpu.dot_dimension_numbers<[1], [0], [0], [1], [0, 0, 1, 1], [], []>} : vector<12x128xf32>, vector<128x128xf32>, vector<12x128xf32> -> vector<12x128xf32>
    %c0_17 = arith.constant 0 : index
    %c0_18 = arith.constant 0 : index
    %26 = vector.load %arg7[%c0_17, %c0_18] : memref<1x128xf32, #tpu.memory_space<vmem>>, vector<1x128xf32>
    %27 = vector.broadcast %26 : vector<1x128xf32> to vector<12x128xf32>
    %28 = arith.addf %25, %27 : vector<12x128xf32>
    %29 = arith.addf %0, %28 : vector<12x128xf32>
    %cst_19 = arith.constant dense<0.000000e+00> : vector<12xf32>
    %30 = vector.multi_reduction <add>, %29, %cst_19 [1] : vector<12x128xf32> to vector<12xf32>
    %31 = vector.shape_cast %30 : vector<12xf32> to vector<12x1xf32>
    %cst_20 = arith.constant 1.280000e+02 : f32
    %32 = vector.broadcast %cst_20 : f32 to vector<12x1xf32>
    %33 = arith.divf %31, %32 : vector<12x1xf32>
    %34 = vector.broadcast %33 : vector<12x1xf32> to vector<12x128xf32>
    %35 = arith.subf %29, %34 : vector<12x128xf32>
    %36 = vector.broadcast %33 : vector<12x1xf32> to vector<12x128xf32>
    %37 = arith.subf %29, %36 : vector<12x128xf32>
    %38 = arith.mulf %35, %37 : vector<12x128xf32>
    %cst_21 = arith.constant dense<0.000000e+00> : vector<12xf32>
    %39 = vector.multi_reduction <add>, %38, %cst_21 [1] : vector<12x128xf32> to vector<12xf32>
    %40 = vector.shape_cast %39 : vector<12xf32> to vector<12x1xf32>
    %cst_22 = arith.constant 1.280000e+02 : f32
    %41 = vector.broadcast %cst_22 : f32 to vector<12x1xf32>
    %42 = arith.divf %40, %41 : vector<12x1xf32>
    %43 = vector.broadcast %33 : vector<12x1xf32> to vector<12x128xf32>
    %44 = arith.subf %29, %43 : vector<12x128xf32>
    %cst_23 = arith.constant 9.99999974E-6 : f32
    %45 = vector.broadcast %cst_23 : f32 to vector<12x1xf32>
    %46 = arith.addf %42, %45 : vector<12x1xf32>
    %47 = math.rsqrt %46 : vector<12x1xf32>
    %48 = vector.broadcast %47 : vector<12x1xf32> to vector<12x128xf32>
    %49 = arith.mulf %44, %48 : vector<12x128xf32>
    %c0_24 = arith.constant 0 : index
    %c0_25 = arith.constant 0 : index
    %50 = vector.load %arg8[%c0_24, %c0_25] : memref<1x128xf32, #tpu.memory_space<vmem>>, vector<1x128xf32>
    %51 = vector.broadcast %50 : vector<1x128xf32> to vector<12x128xf32>
    %52 = arith.mulf %49, %51 : vector<12x128xf32>
    %c0_26 = arith.constant 0 : index
    %c0_27 = arith.constant 0 : index
    %53 = vector.load %arg9[%c0_26, %c0_27] : memref<1x128xf32, #tpu.memory_space<vmem>>, vector<1x128xf32>
    %54 = vector.broadcast %53 : vector<1x128xf32> to vector<12x128xf32>
    %55 = arith.addf %52, %54 : vector<12x128xf32>
    %c0_28 = arith.constant 0 : index
    %c0_29 = arith.constant 0 : index
    %56 = vector.load %arg10[%c0_28, %c0_29] : memref<12x128xf32, #tpu.memory_space<vmem>>, vector<12x128xf32>
    tpu.vector_store %arg10[%c0_28, %c0_29], %55 {strides = array<i32>} : memref<12x128xf32, #tpu.memory_space<vmem>>, vector<12x128xf32>,
    return
  }
  func.func @transform_0(%arg0: i32) -> (i32, i32) {
    %c0_i32 = arith.constant 0 : i32
    %c0_i32_0 = arith.constant 0 : i32
    return %arg0, %c0_i32 : i32, i32
  }
  func.func @transform_1(%arg0: i32) -> (i32, i32) {
    %c0_i32 = arith.constant 0 : i32
    %c0_i32_0 = arith.constant 0 : i32
    %c0_i32_1 = arith.constant 0 : i32
    return %c0_i32, %c0_i32_0 : i32, i32
  }
  func.func @transform_2(%arg0: i32) -> (i32, i32) {
    %c0_i32 = arith.constant 0 : i32
    %c0_i32_0 = arith.constant 0 : i32
    %c0_i32_1 = arith.constant 0 : i32
    return %c0_i32, %c0_i32_0 : i32, i32
  }
  func.func @transform_3(%arg0: i32) -> (i32, i32) {
    %c0_i32 = arith.constant 0 : i32
    %c0_i32_0 = arith.constant 0 : i32
    %c0_i32_1 = arith.constant 0 : i32
    return %c0_i32, %c0_i32_0 : i32, i32
  }
  func.func @transform_4(%arg0: i32) -> (i32, i32) {
    %c0_i32 = arith.constant 0 : i32
    %c0_i32_0 = arith.constant 0 : i32
    %c0_i32_1 = arith.constant 0 : i32
    return %c0_i32, %c0_i32_0 : i32, i32
  }
  func.func @transform_5(%arg0: i32) -> (i32, i32) {
    %c0_i32 = arith.constant 0 : i32
    %c0_i32_0 = arith.constant 0 : i32
    %c0_i32_1 = arith.constant 0 : i32
    return %c0_i32, %c0_i32_0 : i32, i32
  }
  func.func @transform_6(%arg0: i32) -> (i32, i32) {
    %c0_i32 = arith.constant 0 : i32
    %c0_i32_0 = arith.constant 0 : i32
    %c0_i32_1 = arith.constant 0 : i32
    return %c0_i32, %c0_i32_0 : i32, i32
  }
  func.func @transform_7(%arg0: i32) -> (i32, i32) {
    %c0_i32 = arith.constant 0 : i32
    %c0_i32_0 = arith.constant 0 : i32
    %c0_i32_1 = arith.constant 0 : i32
    return %c0_i32, %c0_i32_0 : i32, i32
  }
  func.func @transform_8(%arg0: i32) -> (i32, i32) {
    %c0_i32 = arith.constant 0 : i32
    %c0_i32_0 = arith.constant 0 : i32
    %c0_i32_1 = arith.constant 0 : i32
    return %c0_i32, %c0_i32_0 : i32, i32
  }
  func.func @transform_9(%arg0: i32) -> (i32, i32) {
    %c0_i32 = arith.constant 0 : i32
    %c0_i32_0 = arith.constant 0 : i32
    return %arg0, %c0_i32 : i32, i32
  }
}

</mosaic_0001>

<llo_original>
// kernel: tpu_custom_call.1
$region0: #{tpu_custom_call.1}
  #allocation0 [shape = 'u32[]', space=smem, size = 0x4, offset = 0x4, fixed_abs, tag = 'smem constant byte address 0x4 - core index']
  #allocation1 [shape = 'u32[144,128]{1,0:T(1,128)}', space=vmem, size = 0x12000, scoped, tag = 'internal scratch']
  %s0 = inlined_call_operand.hbm [shape: f32[12,128], index: 0, kind: input, shape index: {}]
  %s1 = inlined_call_operand.vmem [shape: f32[48,12], index: 1, kind: input, shape index: {}]
  %s2 = inlined_call_operand.vmem [shape: f32[48,1], index: 2, kind: input, shape index: {}]
  %s3 = inlined_call_operand.hbm [shape: f32[12,48], index: 3, kind: input, shape index: {}]
  %s4 = inlined_call_operand.vmem [shape: f32[12,1], index: 4, kind: input, shape index: {}]
  %s5 = inlined_call_operand.vmem [shape: f32[128,128], index: 5, kind: input, shape index: {}]
  %s6 = inlined_call_operand.vmem [shape: f32[1,128], index: 6, kind: input, shape index: {}]
  %s7 = inlined_call_operand.vmem [shape: f32[1,128], index: 7, kind: input, shape index: {}]
  %s8 = inlined_call_operand.vmem [shape: f32[1,128], index: 8, kind: input, shape index: {}]
  %s9 = inlined_call_operand.hbm [shape: f32[12,128], index: 9, kind: output, shape index: {}]
  %s10 = sld [smem:[#allocation0]]
  $region54: #{tpu_custom_call.1} parent=0
    _
  %s12 = ssub.s32 1, %s10
  %s13 = scalar_select 0, %s12, %s10
  $region1: #{tpu_custom_call.1} parent=0
    #allocation2 [shape = 'u8[8192]{0}', space=vmem, size = 0x2000, scoped, tag = 'input window, operand 0, single buffered']
    #allocation3 [shape = 's32[1]{0}', space=sflag, size = 0x4, scoped, tag = 'scoped memory for tpu_custom_call.1']
    #allocation4 [shape = 's32[1]{0}', space=sflag, size = 0x4, scoped, tag = 'scoped memory for tpu_custom_call.1']
    #allocation5 [shape = 'u8[8192]{0}', space=vmem, size = 0x2000, scoped, tag = 'input window, operand 3, single buffered']
    #allocation6 [shape = 's32[1]{0}', space=sflag, size = 0x4, scoped, tag = 'scoped memory for tpu_custom_call.1']
    #allocation7 [shape = 'u8[8192]{0}', space=vmem, size = 0x2000, scoped, tag = 'output window, operand 0, single buffered']
    %14 = vsyncpa [#allocation3], 0
    %15 = vsyncpa [#allocation6], 0
    %16 = vsyncpa [#allocation4], 0
    // Predicated region
    $region2: #{tpu_custom_call.1} parent=1 // pred_check
      _
    $region3: #{tpu_custom_call.1} parent=1 // pred_check_branch
      %18 = sbr.rel (0) target = $region5
    $region4: #{tpu_custom_call.1} parent=1 // pred_region
      %s20 = ssub.s32 256, 256
      %21 = vsyncadd [#allocation3], %s20
      %s22 = sshll.u32 [#allocation2], 4
      %s23 = int_to_ptr.vmem [resolvable:$true] %s22
      %28 = dma.hbm_to_vmem [thread:$0]  %s0, 256, %s23, [#allocation3], 128, 128, 8
    $region5: #{tpu_custom_call.1} parent=1 // pred_fallthru
      _
    // Predicated region
    $region6: #{tpu_custom_call.1} parent=1 // pred_check
      _
    $region7: #{tpu_custom_call.1} parent=1 // pred_check_branch
      %30 = sbr.rel (0) target = $region9
    $region8: #{tpu_custom_call.1} parent=1 // pred_region
      _
    $region9: #{tpu_custom_call.1} parent=1 // pred_fallthru
      _
    // Predicated region
    $region10: #{tpu_custom_call.1} parent=1 // pred_check
      _
    $region11: #{tpu_custom_call.1} parent=1 // pred_check_branch
      %32 = sbr.rel (0) target = $region13
    $region12: #{tpu_custom_call.1} parent=1 // pred_region
      _
    $region13: #{tpu_custom_call.1} parent=1 // pred_fallthru
      _
    // Predicated region
    $region14: #{tpu_custom_call.1} parent=1 // pred_check
      _
    $region15: #{tpu_custom_call.1} parent=1 // pred_check_branch
      %34 = sbr.rel (0) target = $region17
    $region16: #{tpu_custom_call.1} parent=1 // pred_region
      %s36 = ssub.s32 256, 256
      %37 = vsyncadd [#allocation6], %s36
      %s38 = sshll.u32 [#allocation5], 4
      %s39 = int_to_ptr.vmem [resolvable:$true] %s38
      %44 = dma.hbm_to_vmem [thread:$0]  %s3, 256, %s39, [#allocation6], 128, 128, 8
    $region17: #{tpu_custom_call.1} parent=1 // pred_fallthru
      _
    // Predicated region
    $region18: #{tpu_custom_call.1} parent=1 // pred_check
      _
    $region19: #{tpu_custom_call.1} parent=1 // pred_check_branch
      %46 = sbr.rel (0) target = $region21
    $region20: #{tpu_custom_call.1} parent=1 // pred_region
      _
    $region21: #{tpu_custom_call.1} parent=1 // pred_fallthru
      _
    // Predicated region
    $region22: #{tpu_custom_call.1} parent=1 // pred_check
      _
    $region23: #{tpu_custom_call.1} parent=1 // pred_check_branch
      %48 = sbr.rel (0) target = $region25
    $region24: #{tpu_custom_call.1} parent=1 // pred_region
      _
    $region25: #{tpu_custom_call.1} parent=1 // pred_fallthru
      _
    // Predicated region
    $region26: #{tpu_custom_call.1} parent=1 // pred_check
      _
    $region27: #{tpu_custom_call.1} parent=1 // pred_check_branch
      %50 = sbr.rel (0) target = $region29
    $region28: #{tpu_custom_call.1} parent=1 // pred_region
      _
    $region29: #{tpu_custom_call.1} parent=1 // pred_fallthru
      _
    // Predicated region
    $region30: #{tpu_custom_call.1} parent=1 // pred_check
      _
    $region31: #{tpu_custom_call.1} parent=1 // pred_check_branch
      %52 = sbr.rel (0) target = $region33
    $region32: #{tpu_custom_call.1} parent=1 // pred_region
      _
    $region33: #{tpu_custom_call.1} parent=1 // pred_fallthru
      _
    // Predicated region
    $region34: #{tpu_custom_call.1} parent=1 // pred_check
      _
    $region35: #{tpu_custom_call.1} parent=1 // pred_check_branch
      %54 = sbr.rel (0) target = $region37
    $region36: #{tpu_custom_call.1} parent=1 // pred_region
      _
    $region37: #{tpu_custom_call.1} parent=1 // pred_fallthru
      _
    // Predicated region
    $region38: #{tpu_custom_call.1} parent=1 // pred_check
      _
    $region39: #{tpu_custom_call.1} parent=1 // pred_check_branch
      %56 = sbr.rel (0) target = $region41
    $region40: #{tpu_custom_call.1} parent=1 // pred_region
      %57 = dma.done [#allocation3], 256
    $region41: #{tpu_custom_call.1} parent=1 // pred_fallthru
      _
    // Predicated region
    $region42: #{tpu_custom_call.1} parent=1 // pred_check
      _
    $region43: #{tpu_custom_call.1} parent=1 // pred_check_branch
      %59 = sbr.rel (0) target = $region45
    $region44: #{tpu_custom_call.1} parent=1 // pred_region
      %60 = dma.done [#allocation6], 256
    $region45: #{tpu_custom_call.1} parent=1 // pred_fallthru
      _
    %v61 = vld [vmem:[#allocation2] sm:$0xff]
    %v62 = vld [vmem:[#allocation2 + $0x8] sm:$0xf]
    %v63 = vld [vmem:[%s1] sm:$0xff]
    %v64 = vld [vmem:[%s1 + $0x8] sm:$0xff]
    %v65 = vld [vmem:[%s1 + $0x10] sm:$0xff]
    %v66 = vld [vmem:[%s1 + $0x18] sm:$0xff]
    %v67 = vld [vmem:[%s1 + $0x20] sm:$0xff]
    %v68 = vld [vmem:[%s1 + $0x28] sm:$0xff]
    %v69 = vld [vmem:[%s2] sm:$0xff]
    %v70 = vld [vmem:[%s2 + $0x8] sm:$0xff]
    %v71 = vld [vmem:[%s2 + $0x10] sm:$0xff]
    %v72 = vld [vmem:[%s2 + $0x18] sm:$0xff]
    %v73 = vld [vmem:[%s2 + $0x20] sm:$0xff]
    %v74 = vld [vmem:[%s2 + $0x28] sm:$0xff]
    %76 = vset.pattern.permute.xlu0 0
    %77 = vperm.xlu0 %76, %v69
    %v78 = vpop.permute.xlu0 %77
    %81 = vset.pattern.permute.xlu0 0
    %82 = vperm.xlu0 %81, %v70
    %v83 = vpop.permute.xlu0 %82
    %86 = vset.pattern.permute.xlu0 0
    %87 = vperm.xlu0 %86, %v71
    %v88 = vpop.permute.xlu0 %87
    %91 = vset.pattern.permute.xlu0 0
    %92 = vperm.xlu0 %91, %v72
    %v93 = vpop.permute.xlu0 %92
    %96 = vset.pattern.permute.xlu0 0
    %97 = vperm.xlu0 %96, %v73
    %v98 = vpop.permute.xlu0 %97
    %101 = vset.pattern.permute.xlu0 0
    %102 = vperm.xlu0 %101, %v74
    %v103 = vpop.permute.xlu0 %102
    %vm105 = vcmask 97280
    %v107 = vsel %vm105, %v63, 0
    %v110 = vsel %vm105, %v64, 0
    %v113 = vsel %vm105, %v65, 0
    %v116 = vsel %vm105, %v66, 0
    %v119 = vsel %vm105, %v67, 0
    %v122 = vsel %vm105, %v68, 0
    %vm124 = vcmask 1043456
    %v126 = vsel %vm124, %v62, 0
    %128 = vmatprep.subr.mxu0 0.0
    %129 = vmatpush1.msra.mxu0 0.0
    %130 = vmatprep.subr.mxu0 0.0
    %131 = vmatpush1.msra.mxu0 0.0
    %132 = vmatprep.subr.mxu0 0.0
    %133 = vmatpush1.msra.mxu0 0.0
    %134 = vmatprep.subr.mxu0 0.0
    %135 = vmatpush1.msra.mxu0 0.0
    %136 = vmatprep.subr.mxu0 0.0
    %137 = vmatpush1.msra.mxu0 0.0
    %138 = vmatprep.subr.mxu0 0.0
    %139 = vmatpush1.msra.mxu0 0.0
    %140 = vmatprep.subr.mxu0 0.0
    %141 = vmatpush1.msra.mxu0 0.0
    %142 = vmatprep.subr.mxu0 0.0
    %143 = vmatpush1.msra.mxu0 0.0
    %144 = vmatprep.subr.mxu0 0.0
    %145 = vmatpush1.msra.mxu0 0.0
    %146 = vmatprep.subr.mxu0 0.0
    %147 = vmatpush1.msra.mxu0 0.0
    %148 = vmatprep.subr.mxu0 0.0
    %149 = vmatpush1.msra.mxu0 0.0
    %150 = vmatprep.subr.mxu0 0.0
    %151 = vmatpush1.msra.mxu0 0.0
    %152 = vmatprep.subr.mxu0 0.0
    %153 = vmatpush1.msra.mxu0 0.0
    %154 = vmatprep.subr.mxu0 0.0
    %155 = vmatpush1.msra.mxu0 0.0
    %156 = vmatprep.subr.mxu0 0.0
    %157 = vmatpush1.msra.mxu0 %v126
    %158 = vmatprep.subr.mxu0 0.0
    %159 = vmatpush1.msra.mxu0 %v61
    %160 = vmatprep.subr.mxu0 0.0
    %161 = vmatpush2.msra.mxu0 0.0
    %162 = vmatprep.subr.mxu0 0.0
    %163 = vmatpush2.msra.mxu0 0.0
    %164 = vmatprep.subr.mxu0 0.0
    %165 = vmatpush2.msra.mxu0 0.0
    %166 = vmatprep.subr.mxu0 0.0
    %167 = vmatpush2.msra.mxu0 0.0
    %168 = vmatprep.subr.mxu0 0.0
    %169 = vmatpush2.msra.mxu0 0.0
    %170 = vmatprep.subr.mxu0 0.0
    %171 = vmatpush2.msra.mxu0 0.0
    %172 = vmatprep.subr.mxu0 0.0
    %173 = vmatpush2.msra.mxu0 0.0
    %174 = vmatprep.subr.mxu0 0.0
    %175 = vmatpush2.msra.mxu0 0.0
    %176 = vmatprep.subr.mxu0 0.0
    %177 = vmatpush2.msra.mxu0 0.0
    %178 = vmatprep.subr.mxu0 0.0
    %179 = vmatpush2.msra.mxu0 0.0
    %180 = vmatprep.subr.mxu0 0.0
    %181 = vmatpush2.msra.mxu0 0.0
    %182 = vmatprep.subr.mxu0 0.0
    %183 = vmatpush2.msra.mxu0 0.0
    %184 = vmatprep.subr.mxu0 0.0
    %185 = vmatpush2.msra.mxu0 0.0
    %186 = vmatprep.subr.mxu0 0.0
    %187 = vmatpush2.msra.mxu0 0.0
    %188 = vmatprep.subr.mxu0 0.0
    %189 = vmatpush2.msra.mxu0 0.0
    %190 = vmatprep.subr.mxu0 0.0
    %191 = vmatpush2.msra.mxu0 0.0
    %192 = vmatprep.mubr.f32.mxu0 0.0
    %193 = vmatmul.mubr.f32.gmra.mxu0 %v107
    %v194 = vpop.f32.mrf.mxu0
    %v195 = vadd.f32 %v78, %v194
    %v196 = vpop.f32.mrf.mxu0
    %197 = vmatprep.mubr.f32.mxu0 0.0
    %198 = vmatmul.mubr.f32.gmra.mxu0 %v110
    %v199 = vpop.f32.mrf.mxu0
    %v200 = vadd.f32 %v83, %v199
    %v201 = vpop.f32.mrf.mxu0
    %202 = vmatprep.mubr.f32.mxu0 0.0
    %203 = vmatmul.mubr.f32.gmra.mxu0 %v113
    %v204 = vpop.f32.mrf.mxu0
    %v205 = vadd.f32 %v88, %v204
    %v206 = vpop.f32.mrf.mxu0
    %207 = vmatprep.mubr.f32.mxu0 0.0
    %208 = vmatmul.mubr.f32.gmra.mxu0 %v116
    %v209 = vpop.f32.mrf.mxu0
    %v210 = vadd.f32 %v93, %v209
    %v211 = vpop.f32.mrf.mxu0
    %212 = vmatprep.mubr.f32.mxu0 0.0
    %213 = vmatmul.mubr.f32.gmra.mxu0 %v119
    %v214 = vpop.f32.mrf.mxu0
    %v215 = vadd.f32 %v98, %v214
    %v216 = vpop.f32.mrf.mxu0
    %217 = vmatprep.mubr.f32.mxu0 0.0
    %218 = vmatmul.mubr.f32.gmra.mxu0 %v122
    %v219 = vpop.f32.mrf.mxu0
    %v220 = vadd.f32 %v103, %v219
    %v221 = vpop.f32.mrf.mxu0
    %222 = vdwg.mxu0
    %v223 = vmul.f32 %v195, %v195
    %v224 = vmul.f32 %v200, %v200
    %v225 = vmul.f32 %v205, %v205
    %v226 = vmul.f32 %v210, %v210
    %v227 = vmul.f32 %v215, %v215
    %v228 = vmul.f32 %v220, %v220
    %v229 = vmul.f32 %v195, %v223
    %v230 = vmul.f32 %v200, %v224
    %v231 = vmul.f32 %v205, %v225
    %v232 = vmul.f32 %v210, %v226
    %v233 = vmul.f32 %v215, %v227
    %v234 = vmul.f32 %v220, %v228
    %v235 = vmul.f32 %v229, 0.044715
    %v236 = vmul.f32 %v230, 0.044715
    %v237 = vmul.f32 %v231, 0.044715
    %v238 = vmul.f32 %v232, 0.044715
    %v239 = vmul.f32 %v233, 0.044715
    %v240 = vmul.f32 %v234, 0.044715
    %v241 = vadd.f32 %v195, %v235
    %v242 = vadd.f32 %v200, %v236
    %v243 = vadd.f32 %v205, %v237
    %v244 = vadd.f32 %v210, %v238
    %v245 = vadd.f32 %v215, %v239
    %v246 = vadd.f32 %v220, %v240
    %v247 = vmul.f32 %v241, 0.7978846
    %v248 = vmul.f32 %v242, 0.7978846
    %v249 = vmul.f32 %v243, 0.7978846
    %v250 = vmul.f32 %v244, 0.7978846
    %v251 = vmul.f32 %v245, 0.7978846
    %v252 = vmul.f32 %v246, 0.7978846
    %v253 = vtanh.pop %v247
    %v254 = vtanh.pop %v248
    %v255 = vtanh.pop %v249
    %v256 = vtanh.pop %v250
    %v257 = vtanh.pop %v251
    %v258 = vtanh.pop %v252
    %v259 = vadd.f32 %v253, 1.0
    %v260 = vadd.f32 %v254, 1.0
    %v261 = vadd.f32 %v255, 1.0
    %v262 = vadd.f32 %v256, 1.0
    %v263 = vadd.f32 %v257, 1.0
    %v264 = vadd.f32 %v258, 1.0
    %v265 = vmul.f32 %v259, 0.5
    %v266 = vmul.f32 %v260, 0.5
    %v267 = vmul.f32 %v261, 0.5
    %v268 = vmul.f32 %v262, 0.5
    %v269 = vmul.f32 %v263, 0.5
    %v270 = vmul.f32 %v264, 0.5
    %v271 = vmul.f32 %v195, %v265
    %v272 = vmul.f32 %v200, %v266
    %v273 = vmul.f32 %v205, %v267
    %v274 = vmul.f32 %v210, %v268
    %v275 = vmul.f32 %v215, %v269
    %v276 = vmul.f32 %v220, %v270
    %v277 = vld [vmem:[#allocation5] sm:$0xff]
    %v278 = vld [vmem:[#allocation5 + $0x8] sm:$0xf]
    %v279 = vld [vmem:[%s4] sm:$0xff]
    %v280 = vld [vmem:[%s4 + $0x8] sm:$0xf]
    %282 = vset.pattern.permute.xlu0 0
    %283 = vperm.xlu0 %282, %v279
    %v284 = vpop.permute.xlu0 %283
    %287 = vset.pattern.permute.xlu0 0
    %288 = vperm.xlu0 %287, %v280
    %v289 = vpop.permute.xlu0 %288
    %vm291 = vcmask 392192
    %v293 = vsel %vm291, %v277, 0
    %v296 = vsel %vm291, %v278, 0
    %298 = vmatprep.subr.mxu0 0.0
    %299 = vmatpush1.msra.mxu0 0.0
    %300 = vmatprep.subr.mxu0 0.0
    %301 = vmatpush1.msra.mxu0 0.0
    %302 = vmatprep.subr.mxu0 0.0
    %303 = vmatpush1.msra.mxu0 0.0
    %304 = vmatprep.subr.mxu0 0.0
    %305 = vmatpush1.msra.mxu0 0.0
    %306 = vmatprep.subr.mxu0 0.0
    %307 = vmatpush1.msra.mxu0 0.0
    %308 = vmatprep.subr.mxu0 0.0
    %309 = vmatpush1.msra.mxu0 0.0
    %310 = vmatprep.subr.mxu0 0.0
    %311 = vmatpush1.msra.mxu0 0.0
    %312 = vmatprep.subr.mxu0 0.0
    %313 = vmatpush1.msra.mxu0 0.0
    %314 = vmatprep.subr.mxu0 0.0
    %315 = vmatpush1.msra.mxu0 0.0
    %316 = vmatprep.subr.mxu0 0.0
    %317 = vmatpush1.msra.mxu0 0.0
    %318 = vmatprep.subr.mxu0 0.0
    %319 = vmatpush1.msra.mxu0 %v276
    %320 = vmatprep.subr.mxu0 0.0
    %321 = vmatpush1.msra.mxu0 %v275
    %322 = vmatprep.subr.mxu0 0.0
    %323 = vmatpush1.msra.mxu0 %v274
    %324 = vmatprep.subr.mxu0 0.0
    %325 = vmatpush1.msra.mxu0 %v273
    %326 = vmatprep.subr.mxu0 0.0
    %327 = vmatpush1.msra.mxu0 %v272
    %328 = vmatprep.subr.mxu0 0.0
    %329 = vmatpush1.msra.mxu0 %v271
    %330 = vmatprep.subr.mxu0 0.0
    %331 = vmatpush2.msra.mxu0 0.0
    %332 = vmatprep.subr.mxu0 0.0
    %333 = vmatpush2.msra.mxu0 0.0
    %334 = vmatprep.subr.mxu0 0.0
    %335 = vmatpush2.msra.mxu0 0.0
    %336 = vmatprep.subr.mxu0 0.0
    %337 = vmatpush2.msra.mxu0 0.0
    %338 = vmatprep.subr.mxu0 0.0
    %339 = vmatpush2.msra.mxu0 0.0
    %340 = vmatprep.subr.mxu0 0.0
    %341 = vmatpush2.msra.mxu0 0.0
    %342 = vmatprep.subr.mxu0 0.0
    %343 = vmatpush2.msra.mxu0 0.0
    %344 = vmatprep.subr.mxu0 0.0
    %345 = vmatpush2.msra.mxu0 0.0
    %346 = vmatprep.subr.mxu0 0.0
    %347 = vmatpush2.msra.mxu0 0.0
    %348 = vmatprep.subr.mxu0 0.0
    %349 = vmatpush2.msra.mxu0 0.0
    %350 = vmatprep.subr.mxu0 0.0
    %351 = vmatpush2.msra.mxu0 0.0
    %352 = vmatprep.subr.mxu0 0.0
    %353 = vmatpush2.msra.mxu0 0.0
    %354 = vmatprep.subr.mxu0 0.0
    %355 = vmatpush2.msra.mxu0 0.0
    %356 = vmatprep.subr.mxu0 0.0
    %357 = vmatpush2.msra.mxu0 0.0
    %358 = vmatprep.subr.mxu0 0.0
    %359 = vmatpush2.msra.mxu0 0.0
    %360 = vmatprep.subr.mxu0 0.0
    %361 = vmatpush2.msra.mxu0 0.0
    %362 = vmatprep.mubr.f32.mxu0 0.0
    %363 = vmatmul.mubr.f32.gmra.mxu0 %v293
    %v364 = vpop.f32.mrf.mxu0
    %v365 = vadd.f32 %v284, %v364
    %v366 = vpop.f32.mrf.mxu0
    %367 = vmatprep.mubr.f32.mxu0 0.0
    %368 = vmatmul.mubr.f32.gmra.mxu0 %v296
    %v369 = vpop.f32.mrf.mxu0
    %v370 = vadd.f32 %v289, %v369
    %v371 = vpop.f32.mrf.mxu0
    %372 = vdwg.mxu0
    %v373 = vld [vmem:[%s5] sm:$0xff]
    %v374 = vld [vmem:[%s5 + $0x8] sm:$0xff]
    %v375 = vld [vmem:[%s5 + $0x10] sm:$0xff]
    %v376 = vld [vmem:[%s5 + $0x18] sm:$0xff]
    %v377 = vld [vmem:[%s5 + $0x20] sm:$0xff]
    %v378 = vld [vmem:[%s5 + $0x28] sm:$0xff]
    %v379 = vld [vmem:[%s5 + $0x30] sm:$0xff]
    %v380 = vld [vmem:[%s5 + $0x38] sm:$0xff]
    %v381 = vld [vmem:[%s5 + $0x40] sm:$0xff]
    %v382 = vld [vmem:[%s5 + $0x48] sm:$0xff]
    %v383 = vld [vmem:[%s5 + $0x50] sm:$0xff]
    %v384 = vld [vmem:[%s5 + $0x58] sm:$0xff]
    %v385 = vld [vmem:[%s5 + $0x60] sm:$0xff]
    %v386 = vld [vmem:[%s5 + $0x68] sm:$0xff]
    %v387 = vld [vmem:[%s5 + $0x70] sm:$0xff]
    %v388 = vld [vmem:[%s5 + $0x78] sm:$0xff]
    %v389 = vld [vmem:[%s6] sm:$0x1]
    %v391 = vlaneseq
    %v392 = vshrl.u32 %v391, 7
    %v393 = vsub.s32 0, %v392
    %v394 = vrot.slane %v389, %v393
    %396 = vmatprep.subr.mxu0 0.0
    %397 = vmatpush1.msra.mxu0 %v388
    %398 = vmatprep.subr.mxu0 0.0
    %399 = vmatpush1.msra.mxu0 %v387
    %400 = vmatprep.subr.mxu0 0.0
    %401 = vmatpush1.msra.mxu0 %v386
    %402 = vmatprep.subr.mxu0 0.0
    %403 = vmatpush1.msra.mxu0 %v385
    %404 = vmatprep.subr.mxu0 0.0
    %405 = vmatpush1.msra.mxu0 %v384
    %406 = vmatprep.subr.mxu0 0.0
    %407 = vmatpush1.msra.mxu0 %v383
    %408 = vmatprep.subr.mxu0 0.0
    %409 = vmatpush1.msra.mxu0 %v382
    %410 = vmatprep.subr.mxu0 0.0
    %411 = vmatpush1.msra.mxu0 %v381
    %412 = vmatprep.subr.mxu0 0.0
    %413 = vmatpush1.msra.mxu0 %v380
    %414 = vmatprep.subr.mxu0 0.0
    %415 = vmatpush1.msra.mxu0 %v379
    %416 = vmatprep.subr.mxu0 0.0
    %417 = vmatpush1.msra.mxu0 %v378
    %418 = vmatprep.subr.mxu0 0.0
    %419 = vmatpush1.msra.mxu0 %v377
    %420 = vmatprep.subr.mxu0 0.0
    %421 = vmatpush1.msra.mxu0 %v376
    %422 = vmatprep.subr.mxu0 0.0
    %423 = vmatpush1.msra.mxu0 %v375
    %424 = vmatprep.subr.mxu0 0.0
    %425 = vmatpush1.msra.mxu0 %v374
    %426 = vmatprep.subr.mxu0 0.0
    %427 = vmatpush1.msra.mxu0 %v373
    %428 = vmatprep.subr.mxu0 0.0
    %429 = vmatpush2.msra.mxu0 0.0
    %430 = vmatprep.subr.mxu0 0.0
    %431 = vmatpush2.msra.mxu0 0.0
    %432 = vmatprep.subr.mxu0 0.0
    %433 = vmatpush2.msra.mxu0 0.0
    %434 = vmatprep.subr.mxu0 0.0
    %435 = vmatpush2.msra.mxu0 0.0
    %436 = vmatprep.subr.mxu0 0.0
    %437 = vmatpush2.msra.mxu0 0.0
    %438 = vmatprep.subr.mxu0 0.0
    %439 = vmatpush2.msra.mxu0 0.0
    %440 = vmatprep.subr.mxu0 0.0
    %441 = vmatpush2.msra.mxu0 0.0
    %442 = vmatprep.subr.mxu0 0.0
    %443 = vmatpush2.msra.mxu0 0.0
    %444 = vmatprep.subr.mxu0 0.0
    %445 = vmatpush2.msra.mxu0 0.0
    %446 = vmatprep.subr.mxu0 0.0
    %447 = vmatpush2.msra.mxu0 0.0
    %448 = vmatprep.subr.mxu0 0.0
    %449 = vmatpush2.msra.mxu0 0.0
    %450 = vmatprep.subr.mxu0 0.0
    %451 = vmatpush2.msra.mxu0 0.0
    %452 = vmatprep.subr.mxu0 0.0
    %453 = vmatpush2.msra.mxu0 0.0
    %454 = vmatprep.subr.mxu0 0.0
    %455 = vmatpush2.msra.mxu0 0.0
    %456 = vmatprep.subr.mxu0 0.0
    %457 = vmatpush2.msra.mxu0 0.0
    %458 = vmatprep.subr.mxu0 0.0
    %459 = vmatpush2.msra.mxu0 0.0
    %460 = vmatprep.mubr.f32.mxu0 0.0
    %461 = vmatmul.mubr.f32.gmra.mxu0 %v365
    %v462 = vpop.f32.mrf.mxu0
    %v463 = vadd.f32 %v394, %v462
    %v464 = vpop.f32.mrf.mxu0
    %465 = vmatprep.mubr.f32.mxu0 0.0
    %466 = vmatmul.mubr.f32.gmra.mxu0 %v370
    %v467 = vpop.f32.mrf.mxu0
    %v468 = vadd.f32 %v394, %v467
    %v469 = vpop.f32.mrf.mxu0
    %470 = vdwg.mxu0
    %v471 = vadd.f32 %v61, %v463
    %v472 = vadd.f32 %v62, %v468
    %473 = vadd.xlane.f32.xlu0 %v471
    %v474 = vpop.xlane.xlu0 %473
    %v475 = vsel %vm124, %v472, 0.0
    %476 = vadd.xlane.f32.xlu0 %v475
    %v477 = vpop.xlane.xlu0 %476
    %v478 = vrcp.pop 128.0
    %v479 = vmul.f32 %v474, %v478
    %v480 = vmul.f32 %v477, %v478
    %v481 = vsub.f32 %v471, %v479
    %v482 = vsub.f32 %v472, %v480
    %v483 = vmul.f32 %v481, %v481
    %v484 = vmul.f32 %v482, %v482
    %485 = vadd.xlane.f32.xlu0 %v483
    %v486 = vpop.xlane.xlu0 %485
    %v487 = vsel %vm124, %v484, 0.0
    %488 = vadd.xlane.f32.xlu0 %v487
    %v489 = vpop.xlane.xlu0 %488
    %v490 = vmul.f32 %v486, %v478
    %v491 = vmul.f32 %v489, %v478
    %v492 = vadd.f32 %v490, 1e-05
    %v493 = vadd.f32 %v491, 1e-05
    %v494 = vrsqrt.pop %v492
    %v495 = vrsqrt.pop %v493
    %v496 = vmul.f32 %v481, %v494
    %v497 = vmul.f32 %v482, %v495
    %v498 = vld [vmem:[%s7] sm:$0x1]
    %v500 = vlaneseq
    %v501 = vshrl.u32 %v500, 7
    %v502 = vsub.s32 0, %v501
    %v503 = vrot.slane %v498, %v502
    %v505 = vmul.f32 %v496, %v503
    %v506 = vmul.f32 %v497, %v503
    %v507 = vld [vmem:[%s8] sm:$0x1]
    %v509 = vlaneseq
    %v510 = vshrl.u32 %v509, 7
    %v511 = vsub.s32 0, %v510
    %v512 = vrot.slane %v507, %v511
    %v514 = vadd.f32 %v505, %v512
    %v515 = vadd.f32 %v506, %v512
    %516 = vst [vmem:[#allocation7] sm:$0xff] %v514
    %517 = vst [vmem:[#allocation7 + $0x8] sm:$0xf] %v515
    // Predicated region
    $region46: #{tpu_custom_call.1} parent=1 // pred_check
      _
    $region47: #{tpu_custom_call.1} parent=1 // pred_check_branch
      %519 = sbr.rel (0) target = $region49
    $region48: #{tpu_custom_call.1} parent=1 // pred_region
      %s521 = ssub.s32 256, 256
      %522 = vsyncadd [#allocation4], %s521
      %s523 = sshll.u32 [#allocation7], 4
      %s524 = int_to_ptr.vmem [resolvable:$true] %s523
      %529 = dma.vmem_to_hbm [thread:$0]  %s524, 256, %s9, [#allocation4], 128, 128, 8
    $region49: #{tpu_custom_call.1} parent=1 // pred_fallthru
      _
    // Predicated region
    $region50: #{tpu_custom_call.1} parent=1 // pred_check
      _
    $region51: #{tpu_custom_call.1} parent=1 // pred_check_branch
      %531 = sbr.rel (0) target = $region53
    $region52: #{tpu_custom_call.1} parent=1 // pred_region
      %532 = dma.done [#allocation4], 256
    $region53: #{tpu_custom_call.1} parent=1 // pred_fallthru
      _
    %533 = vsyncpa [#allocation3], 1
    %534 = vsyncpa [#allocation6], 1
    %535 = vsyncpa [#allocation4], 1

</llo_original>
